<compile_context>
chip_gen: v5e
topology: v5e:2x2
jax: 0.10.0
libtpu: 0.0.40
codegen_flags: <defaults>
</compile_context>

<pallas_src>
import functools

import jax
import jax.numpy as jnp
from jax.experimental import pallas as pl
from jax.experimental.pallas import tpu as pltpu


def _ce_kernel(logits_ref, target_ref, nll_ref, m_ref, l_ref, picked_ref,
               *, n_valid, c_valid, tile_n, tile_c, mask_cols, mask_rows):
    """Online logsumexp over class tiles; per-row NLL written at the last tile."""
    i = pl.program_id(0)              # batch tile ("parallel")
    j = pl.program_id(1)              # class tile (innermost reduction, "arbitrary")

    @pl.when(j == 0)
    def _():
        m_ref[...] = jnp.full_like(m_ref, -jnp.inf)
        l_ref[...] = jnp.zeros_like(l_ref)
        picked_ref[...] = jnp.zeros_like(picked_ref)

    x = logits_ref[...]                                 # native dtype (bf16 / f32)
    tgt = target_ref[...]                               # (tile_n, 1) int32

    # global class index of each lane in this tile; (1, tile_c) keeps it small.
    col = jax.lax.broadcasted_iota(jnp.int32, (1, tile_c), 1) + j * tile_c

    if mask_cols:
        # Trailing partial class tile: columns >= C hold undefined data from the
        # clipped DMA; mask them to -inf so they contribute 0 to the logsumexp.
        x = jnp.where(col < c_valid, x, jnp.array(-jnp.inf, dtype=x.dtype))

    # gather logits[row, target[row]]: exactly one hit per row (targets are
    # valid, hence < C), so a native-dtype sum is exact; cast the (tile_n, 1)
    # result to f32 for accumulation across class tiles.
    picked_ref[...] += jnp.sum(
        jnp.where(col == tgt, x, jnp.zeros_like(x)),
        axis=-1, keepdims=True).astype(jnp.float32)

    # streaming (online) logsumexp; max/compare on the native dtype, f32
    # running statistics, f32 cast only inside the exp argument.
    m_prev = m_ref[...]
    tile_max = jnp.max(x, axis=-1, keepdims=True).astype(jnp.float32)
    m_new = jnp.maximum(m_prev, tile_max)
    p = jnp.exp(x.astype(jnp.float32) - m_new)
    l_ref[...] = (l_ref[...] * jnp.exp(m_prev - m_new)
                  + jnp.sum(p, axis=-1, keepdims=True))
    m_ref[...] = m_new

    @pl.when(j == pl.num_programs(1) - 1)
    def _():
        lse = m_ref[...] + jnp.log(l_ref[...])
        nll = lse - picked_ref[...]
        if mask_rows:
            # rows >= N are undefined (and would not be written back anyway);
            # zero them defensively so any downstream sum over the block is safe.
            row = jax.lax.broadcasted_iota(jnp.int32, (tile_n, 1), 0) + i * tile_n
            nll = jnp.where(row < n_valid, nll, 0.0)
        nll_ref[...] = nll


def _physical_vmem_bytes():
    try:
        return int(getattr(pltpu.get_tpu_info(), "vmem_capacity_bytes"))
    except Exception:
        return 64 * 1024 * 1024          # safe assumption (v7x per-TC VMEM)


def ce_loss(logits, target, *, tile_n=None, tile_c=None):
    """Mean cross-entropy over the batch. logits: (N, C) float, target: (N,) int."""
    n, c = logits.shape
    if n == 0:
        return jnp.float32(jnp.nan)       # matches F.cross_entropy on empty batch
    itemsize = jnp.dtype(logits.dtype).itemsize

    # ----- class tile (lane axis, multiple of 128) -----
    if tile_c is None:
        tile_c = 2048
    tile_c = max(128, (int(tile_c) // 128) * 128)
    tile_c = min(tile_c, int(pl.cdiv(c, 128)) * 128)

    # ----- batch tile (sublane axis, multiple of 8) -----
    if tile_n is None:
        # ~4 MiB logits block: big enough to amortize the ~0.35 us per-step
        # overhead and keep the HBM DMA pipeline saturated, small enough that
        # the double-buffered working set stays well inside v7x's 64 MiB VMEM.
        tile_n = max(8, (4 * 1024 * 1024) // (tile_c * itemsize))
        tile_n = min(tile_n, 2048)
        if n >= 16:
            # ensure >= 2 batch tiles so the "parallel" axis shards across both
            # TensorCores on v7x (no-op on single-TC v5e/v6e).
            tile_n = min(tile_n, int(pl.cdiv(int(pl.cdiv(n, 2)), 8)) * 8)
    tile_n = max(8, int(pl.cdiv(int(tile_n), 8)) * 8)
    tile_n = min(tile_n, int(pl.cdiv(n, 8)) * 8)

    grid = (int(pl.cdiv(n, tile_n)), int(pl.cdiv(c, tile_c)))
    mask_cols = (c % tile_c) != 0
    mask_rows = (n % tile_n) != 0

    target_col = target.astype(jnp.int32).reshape(n, 1)

    kernel = functools.partial(
        _ce_kernel, n_valid=n, c_valid=c, tile_n=tile_n, tile_c=tile_c,
        mask_cols=mask_cols, mask_rows=mask_rows)

    # Scoped-VMEM budget from the real live set: double-buffered input block,
    # f32 element-wise temporaries (exp operand/result), tiny column buffers,
    # plus headroom.  Capped at 3/4 of physical VMEM (~48 MiB v7x, ~96 MiB
    # v5e/v6e) so the compiler keeps scratch/double-buffering headroom.
    block_bytes = tile_n * tile_c * itemsize
    f32_tmp_bytes = 2 * tile_n * tile_c * 4
    vmem_need = 2 * block_bytes + f32_tmp_bytes + (1 << 20) + (2 << 20)
    vmem_cap = (_physical_vmem_bytes() * 3) // 4
    vmem_limit = int(min(vmem_cap, max(vmem_need, 32 * 1024 * 1024)))

    nll = pl.pallas_call(
        kernel,
        out_shape=jax.ShapeDtypeStruct((n, 1), jnp.float32),
        grid_spec=pltpu.PrefetchScalarGridSpec(
            num_scalar_prefetch=0,
            grid=grid,
            in_specs=[
                pl.BlockSpec((tile_n, tile_c), lambda i, j: (i, j)),
                pl.BlockSpec((tile_n, 1), lambda i, j: (i, 0)),
            ],
            out_specs=pl.BlockSpec((tile_n, 1), lambda i, j: (i, 0)),
            scratch_shapes=[
                pltpu.VMEM((tile_n, 1), jnp.float32),   # running max m
                pltpu.VMEM((tile_n, 1), jnp.float32),   # running sum l
                pltpu.VMEM((tile_n, 1), jnp.float32),   # picked target logit
            ],
        ),
        compiler_params=pltpu.CompilerParams(
            dimension_semantics=("parallel", "arbitrary"),
            vmem_limit_bytes=vmem_limit,
        ),
    )(logits, target_col)

    # TODO(synk): PyTorch's default ignore_index=-100 is not handled; targets
    # are assumed to be valid class indices in [0, C).
    return jnp.sum(nll) / jnp.float32(n)


def _ce_ref(logits, target):
    lp = jax.nn.log_softmax(logits.astype(jnp.float32), axis=-1)
    return -jnp.mean(jnp.take_along_axis(lp, target[:, None], axis=-1))


if __name__ == "__main__":
    key = jax.random.PRNGKey(0)

    # Case 1: tiny shape, single (partial) tile, ragged class dim masked in-kernel.
    k1, k2 = jax.random.split(key)
    N, C = 8, 32
    logits = jax.random.normal(k1, (N, C), dtype=jnp.float32)
    target = jax.random.randint(k2, (N,), 0, C, dtype=jnp.int32)
    loss = jax.block_until_ready(ce_loss(logits, target))
    ref = _ce_ref(logits, target)
    assert jnp.allclose(loss, ref, atol=1e-5, rtol=1e-5), (loss, ref)

    # Case 2: ragged N and C -> multiple batch/class tiles, in-kernel masking
    # + online logsumexp across class tiles (no wrapper-side padding).
    k3, k4 = jax.random.split(k1)
    N2, C2 = 20, 300
    logits2 = jax.random.normal(k3, (N2, C2), dtype=jnp.float32) * 3.0
    target2 = jax.random.randint(k4, (N2,), 0, C2, dtype=jnp.int32)
    loss2 = jax.block_until_ready(ce_loss(logits2, target2, tile_n=8, tile_c=128))
    ref2 = _ce_ref(logits2, target2)
    assert jnp.allclose(loss2, ref2, atol=1e-5, rtol=1e-5), (loss2, ref2)

    # Case 3: bf16 activations in HBM, bf16-native VPU math + f32 exp/accumulate.
    k5, k6 = jax.random.split(k3)
    N3, C3 = 16, 256
    logits3 = jax.random.normal(k5, (N3, C3), dtype=jnp.float32).astype(jnp.bfloat16)
    target3 = jax.random.randint(k6, (N3,), 0, C3, dtype=jnp.int32)
    loss3 = jax.block_until_ready(ce_loss(logits3, target3, tile_n=8, tile_c=128))
    ref3 = _ce_ref(logits3.astype(jnp.float32), target3)
    assert jnp.allclose(loss3, ref3, atol=2e-2, rtol=2e-2), (loss3, ref3)

    # Case 4: larger, divisible shape using the default (~4 MiB block) tiling,
    # exercising >= 2 batch tiles (megacore path) and multiple class tiles.
    k7, k8 = jax.random.split(k5)
    N4, C4 = 256, 4096
    logits4 = jax.random.normal(k7, (N4, C4), dtype=jnp.bfloat16)
    target4 = jax.random.randint(k8, (N4,), 0, C4, dtype=jnp.int32)
    loss4 = jax.block_until_ready(ce_loss(logits4, target4))
    ref4 = _ce_ref(logits4.astype(jnp.float32), target4)
    assert jnp.allclose(loss4, ref4, atol=2e-2, rtol=2e-2), (loss4, ref4)

    print("KERNEL_OK")
</pallas_src>

<mosaic_0001>
module attributes {stable_mosaic.version = 11 : i64} {
  func.func @_ce_kernel(%arg0: i32, %arg1: i32, %arg2: memref<8x128xf32, #tpu.memory_space<vmem>>, %arg3: memref<8x1xi32, #tpu.memory_space<vmem>>, %arg4: memref<8x1xf32, #tpu.memory_space<vmem>>, %arg5: memref<8x1xf32, #tpu.memory_space<vmem>>, %arg6: memref<8x1xf32, #tpu.memory_space<vmem>>, %arg7: memref<8x1xf32, #tpu.memory_space<vmem>>) attributes {dimension_semantics = [#tpu.dimension_semantics<parallel>, #tpu.dimension_semantics<arbitrary>], iteration_bounds = array<i64: 1, 1>, scalar_prefetch = 0 : i64, scratch_operands = 3 : i64, tpu.core_type = #tpu.core_type<tc>, window_params = [{transform_indices = @transform_0, window_bounds = array<i64: 8, 128>}, {transform_indices = @transform_1, window_bounds = array<i64: 8, 1>}, {transform_indices = @transform_2, window_bounds = array<i64: 8, 1>}]} {
    %c0_i32 = arith.constant 0 : i32
    %0 = arith.cmpi eq, %arg1, %c0_i32 : i32
    %1 = arith.extui %0 : i1 to i32
    %c0_i32_0 = arith.constant 0 : i32
    %2 = arith.cmpi ne, %1, %c0_i32_0 : i32
    scf.if %2 {
      %cst_22 = arith.constant 0xFF800000 : f32
      %44 = vector.broadcast %cst_22 : f32 to vector<8x1xf32>
      %c0_23 = arith.constant 0 : index
      %c0_24 = arith.constant 0 : index
      %45 = vector.load %arg5[%c0_23, %c0_24] : memref<8x1xf32, #tpu.memory_space<vmem>>, vector<8x1xf32>
      tpu.vector_store %arg5[%c0_23, %c0_24], %44 {strides = array<i32>} : memref<8x1xf32, #tpu.memory_space<vmem>>, vector<8x1xf32>,
      %cst_25 = arith.constant 0.000000e+00 : f32
      %46 = vector.broadcast %cst_25 : f32 to vector<8x1xf32>
      %c0_26 = arith.constant 0 : index
      %c0_27 = arith.constant 0 : index
      %47 = vector.load %arg6[%c0_26, %c0_27] : memref<8x1xf32, #tpu.memory_space<vmem>>, vector<8x1xf32>
      tpu.vector_store %arg6[%c0_26, %c0_27], %46 {strides = array<i32>} : memref<8x1xf32, #tpu.memory_space<vmem>>, vector<8x1xf32>,
      %cst_28 = arith.constant 0.000000e+00 : f32
      %48 = vector.broadcast %cst_28 : f32 to vector<8x1xf32>
      %c0_29 = arith.constant 0 : index
      %c0_30 = arith.constant 0 : index
      %49 = vector.load %arg7[%c0_29, %c0_30] : memref<8x1xf32, #tpu.memory_space<vmem>>, vector<8x1xf32>
      tpu.vector_store %arg7[%c0_29, %c0_30], %48 {strides = array<i32>} : memref<8x1xf32, #tpu.memory_space<vmem>>, vector<8x1xf32>,
    } else {
    }
    %c0 = arith.constant 0 : index
    %c0_1 = arith.constant 0 : index
    %3 = vector.load %arg2[%c0, %c0_1] : memref<8x128xf32, #tpu.memory_space<vmem>>, vector<8x128xf32>
    %c0_2 = arith.constant 0 : index
    %c0_3 = arith.constant 0 : index
    %4 = vector.load %arg3[%c0_2, %c0_3] : memref<8x1xi32, #tpu.memory_space<vmem>>, vector<8x1xi32>
    %5 = tpu.iota {dimensions = array<i32: 1>} : vector<1x128xi32>
    %c128_i32 = arith.constant 128 : i32
    %6 = arith.muli %arg1, %c128_i32 : i32
    %7 = vector.broadcast %6 : i32 to vector<1x128xi32>
    %8 = arith.addi %5, %7 : vector<1x128xi32>
    %c32_i32 = arith.constant 32 : i32
    %9 = vector.broadcast %c32_i32 : i32 to vector<1x128xi32>
    %10 = arith.cmpi slt, %8, %9 : vector<1x128xi32>
    %cst = arith.constant 0xFF800000 : f32
    %11 = vector.shape_cast %10 : vector<1x128xi1> to vector<1x128xi1>
    %12 = vector.broadcast %11 : vector<1x128xi1> to vector<8x128xi1>
    %13 = vector.broadcast %cst : f32 to vector<8x128xf32>
    %14 = arith.select %12, %3, %13 : vector<8x128xi1>, vector<8x128xf32>
    %c0_4 = arith.constant 0 : index
    %c0_5 = arith.constant 0 : index
    %15 = vector.load %arg7[%c0_4, %c0_5] : memref<8x1xf32, #tpu.memory_space<vmem>>, vector<8x1xf32>
    %16 = vector.broadcast %8 : vector<1x128xi32> to vector<8x128xi32>
    %17 = vector.broadcast %4 : vector<8x1xi32> to vector<8x128xi32>
    %18 = arith.cmpi eq, %16, %17 : vector<8x128xi32>
    %cst_6 = arith.constant 0.000000e+00 : f32
    %19 = vector.broadcast %cst_6 : f32 to vector<8x128xf32>
    %20 = arith.select %18, %14, %19 : vector<8x128xi1>, vector<8x128xf32>
    %cst_7 = arith.constant dense<0.000000e+00> : vector<8xf32>
    %21 = vector.multi_reduction <add>, %20, %cst_7 [1] : vector<8x128xf32> to vector<8xf32>
    %22 = vector.shape_cast %21 : vector<8xf32> to vector<8x1xf32>
    %23 = arith.addf %15, %22 : vector<8x1xf32>
    %c0_8 = arith.constant 0 : index
    %c0_9 = arith.constant 0 : index
    %24 = vector.load %arg7[%c0_8, %c0_9] : memref<8x1xf32, #tpu.memory_space<vmem>>, vector<8x1xf32>
    tpu.vector_store %arg7[%c0_8, %c0_9], %23 {strides = array<i32>} : memref<8x1xf32, #tpu.memory_space<vmem>>, vector<8x1xf32>,
    %c0_10 = arith.constant 0 : index
    %c0_11 = arith.constant 0 : index
    %25 = vector.load %arg5[%c0_10, %c0_11] : memref<8x1xf32, #tpu.memory_space<vmem>>, vector<8x1xf32>
    %cst_12 = arith.constant dense<0xFF800000> : vector<8xf32>
    %26 = vector.multi_reduction <maximumf>, %14, %cst_12 [1] : vector<8x128xf32> to vector<8xf32>
    %27 = vector.shape_cast %26 : vector<8xf32> to vector<8x1xf32>
    %28 = arith.maximumf %25, %27 : vector<8x1xf32>
    %29 = vector.broadcast %28 : vector<8x1xf32> to vector<8x128xf32>
    %30 = arith.subf %14, %29 : vector<8x128xf32>
    %31 = math.exp %30 : vector<8x128xf32>
    %c0_13 = arith.constant 0 : index
    %c0_14 = arith.constant 0 : index
    %32 = vector.load %arg6[%c0_13, %c0_14] : memref<8x1xf32, #tpu.memory_space<vmem>>, vector<8x1xf32>
    %33 = arith.subf %25, %28 : vector<8x1xf32>
    %34 = math.exp %33 : vector<8x1xf32>
    %35 = arith.mulf %32, %34 : vector<8x1xf32>
    %cst_15 = arith.constant dense<0.000000e+00> : vector<8xf32>
    %36 = vector.multi_reduction <add>, %31, %cst_15 [1] : vector<8x128xf32> to vector<8xf32>
    %37 = vector.shape_cast %36 : vector<8xf32> to vector<8x1xf32>
    %38 = arith.addf %35, %37 : vector<8x1xf32>
    %c0_16 = arith.constant 0 : index
    %c0_17 = arith.constant 0 : index
    %39 = vector.load %arg6[%c0_16, %c0_17] : memref<8x1xf32, #tpu.memory_space<vmem>>, vector<8x1xf32>
    tpu.vector_store %arg6[%c0_16, %c0_17], %38 {strides = array<i32>} : memref<8x1xf32, #tpu.memory_space<vmem>>, vector<8x1xf32>,
    %c0_18 = arith.constant 0 : index
    %c0_19 = arith.constant 0 : index
    %40 = vector.load %arg5[%c0_18, %c0_19] : memref<8x1xf32, #tpu.memory_space<vmem>>, vector<8x1xf32>
    tpu.vector_store %arg5[%c0_18, %c0_19], %28 {strides = array<i32>} : memref<8x1xf32, #tpu.memory_space<vmem>>, vector<8x1xf32>,
    %c0_i32_20 = arith.constant 0 : i32
    %41 = arith.cmpi eq, %arg1, %c0_i32_20 : i32
    %42 = arith.extui %41 : i1 to i32
    %c0_i32_21 = arith.constant 0 : i32
    %43 = arith.cmpi ne, %42, %c0_i32_21 : i32
    scf.if %43 {
      %c0_22 = arith.constant 0 : index
      %c0_23 = arith.constant 0 : index
      %44 = vector.load %arg5[%c0_22, %c0_23] : memref<8x1xf32, #tpu.memory_space<vmem>>, vector<8x1xf32>
      %c0_24 = arith.constant 0 : index
      %c0_25 = arith.constant 0 : index
      %45 = vector.load %arg6[%c0_24, %c0_25] : memref<8x1xf32, #tpu.memory_space<vmem>>, vector<8x1xf32>
      %46 = math.log %45 : vector<8x1xf32>
      %47 = arith.addf %44, %46 : vector<8x1xf32>
      %c0_26 = arith.constant 0 : index
      %c0_27 = arith.constant 0 : index
      %48 = vector.load %arg7[%c0_26, %c0_27] : memref<8x1xf32, #tpu.memory_space<vmem>>, vector<8x1xf32>
      %49 = arith.subf %47, %48 : vector<8x1xf32>
      %c0_28 = arith.constant 0 : index
      %c0_29 = arith.constant 0 : index
      %50 = vector.load %arg4[%c0_28, %c0_29] : memref<8x1xf32, #tpu.memory_space<vmem>>, vector<8x1xf32>
      tpu.vector_store %arg4[%c0_28, %c0_29], %49 {strides = array<i32>} : memref<8x1xf32, #tpu.memory_space<vmem>>, vector<8x1xf32>,
    } else {
    }
    return
  }
  func.func @transform_0(%arg0: i32, %arg1: i32) -> (i32, i32) {
    %c0_i32 = arith.constant 0 : i32
    return %arg0, %arg1 : i32, i32
  }
  func.func @transform_1(%arg0: i32, %arg1: i32) -> (i32, i32) {
    %c0_i32 = arith.constant 0 : i32
    %c0_i32_0 = arith.constant 0 : i32
    return %arg0, %c0_i32 : i32, i32
  }
  func.func @transform_2(%arg0: i32, %arg1: i32) -> (i32, i32) {
    %c0_i32 = arith.constant 0 : i32
    %c0_i32_0 = arith.constant 0 : i32
    return %arg0, %c0_i32 : i32, i32
  }
}

</mosaic_0001>

<llo_original>
// kernel: tpu_custom_call.1
$region0: #{tpu_custom_call.1}
  #allocation0 [shape = 'u32[]', space=smem, size = 0x4, offset = 0x4, fixed_abs, tag = 'smem constant byte address 0x4 - core index']
  #allocation1 [shape = 'u32[72,128]{1,0:T(1,128)}', space=vmem, size = 0x9000, scoped, tag = 'internal scratch']
  #allocation2 [shape = 'f32[8,1]{1,0:T(8,128)}', space=vmem, size = 0x1000, scoped, tag = 'scratch operand']
  #allocation3 [shape = 'f32[8,1]{1,0:T(8,128)}', space=vmem, size = 0x1000, scoped, tag = 'scratch operand']
  #allocation4 [shape = 'f32[8,1]{1,0:T(8,128)}', space=vmem, size = 0x1000, scoped, tag = 'scratch operand']
  %s0 = inlined_call_operand.vmem [shape: f32[8,32], index: 0, kind: input, shape index: {}]
  %s1 = inlined_call_operand.vmem [shape: s32[8,1], index: 1, kind: input, shape index: {}]
  %s2 = inlined_call_operand.vmem [shape: f32[8,1], index: 2, kind: output, shape index: {}]
  %s3 = sld [smem:[#allocation0]]
  $region26: #{tpu_custom_call.1} parent=0
    _
  %s5 = ssub.s32 1, %s3
  %s6 = scalar_select 0, %s5, %s3
  // Predicated region
  $region2: #{tpu_custom_call.1} parent=0 // pred_check
    _
  $region3: #{tpu_custom_call.1} parent=0 // pred_check_branch
    %8 = sbr.rel (0) target = $region5
  $region4: #{tpu_custom_call.1} parent=0 // pred_region
    _
  $region5: #{tpu_custom_call.1} parent=0 // pred_fallthru
    _
  // Predicated region
  $region6: #{tpu_custom_call.1} parent=0 // pred_check
    _
  $region7: #{tpu_custom_call.1} parent=0 // pred_check_branch
    %10 = sbr.rel (0) target = $region9
  $region8: #{tpu_custom_call.1} parent=0 // pred_region
    _
  $region9: #{tpu_custom_call.1} parent=0 // pred_fallthru
    _
  %p11 = scmp.eq.s32.totalorder 0, 0
  // Predicated region
  $region10: #{tpu_custom_call.1} parent=0 // pred_check
    %p12 = pneg %p11
  $region11: #{tpu_custom_call.1} parent=0 // pred_check_branch
    %14 = sbr.rel (%p12) target = $region13
  $region12: #{tpu_custom_call.1} parent=0 // pred_region
    %vm15 = vcmask 7168
    %16 = vst.msk [vmem:[#allocation2] sm:$0xff] %vm15, -inf
    %17 = vst.msk [vmem:[#allocation3] sm:$0xff] %vm15, 0.0
    %18 = vst.msk [vmem:[#allocation4] sm:$0xff] %vm15, 0.0
  $region13: #{tpu_custom_call.1} parent=0 // pred_fallthru
    _
  %v19 = vld [vmem:[%s0] sm:$0xff]
  %v20 = vld [vmem:[%s1] sm:$0xff]
  %v21 = vlaneseq
  %v22 = vand.u32 %v21, 127
  %s23 = smul.u32 0, 128
  %v24 = vstv %s23
  %v25 = vadd.s32 %v22, %v24
  %vm26 = vcmp.lt.s32.totalorder %v25, 32
  %v27 = vsel %vm26, 1, 0
  %vm28 = vcmp.eq.s32.totalorder %v27, 1
  %v29 = vsel %vm28, %v19, -inf
  %v30 = vld [vmem:[#allocation4] sm:$0xff]
  %31 = vset.pattern.permute.xlu0 0
  %32 = vperm.xlu0 %31, %v20
  %v33 = vpop.permute.xlu0 %32
  %vm34 = vcmp.eq.s32.totalorder %v25, %v33
  %v35 = vsel %vm34, %v29, 0.0
  %36 = vadd.xlane.f32.xlu0 %v35
  %v37 = vpop.xlane.xlu0 %36
  %v38 = vadd.f32 %v30, %v37
  %vm39 = vcmask 7168
  %40 = vst.msk [vmem:[#allocation4] sm:$0xff] %vm39, %v38
  %v41 = vld [vmem:[#allocation2] sm:$0xff]
  %42 = vmax.xlane.f32.xlu0 %v29
  %v43 = vpop.xlane.xlu0 %42
  %v44 = vmax.f32 %v41, %v43
  %46 = vset.pattern.permute.xlu0 0
  %47 = vperm.xlu0 %46, %v44
  %v48 = vpop.permute.xlu0 %47
  %v50 = vsub.f32 %v29, %v48
  %v51 = vmul.f32 %v50, 1.442695
  %v52 = vpow.pop %v51
  %v53 = vld [vmem:[#allocation3] sm:$0xff]
  %v54 = vsub.f32 %v41, %v44
  %v55 = vmul.f32 %v54, 1.442695
  %v56 = vpow.pop %v55
  %v57 = vmul.f32 %v53, %v56
  %58 = vadd.xlane.f32.xlu0 %v52
  %v59 = vpop.xlane.xlu0 %58
  %v60 = vadd.f32 %v57, %v59
  %61 = vst.msk [vmem:[#allocation3] sm:$0xff] %vm39, %v60
  %62 = vst.msk [vmem:[#allocation2] sm:$0xff] %vm39, %v44
  // Predicated region
  $region14: #{tpu_custom_call.1} parent=0 // pred_check
    %p63 = pneg %p11
  $region15: #{tpu_custom_call.1} parent=0 // pred_check_branch
    %65 = sbr.rel (%p63) target = $region17
  $region16: #{tpu_custom_call.1} parent=0 // pred_region
    %v66 = vld [vmem:[#allocation2] sm:$0xff]
    %v67 = vld [vmem:[#allocation3] sm:$0xff]
    %v68 = vlog2.pop %v67
    %v69 = vmul.f32 %v68, 0.6931472
    %v70 = vadd.f32 %v66, %v69
    %v71 = vld [vmem:[#allocation4] sm:$0xff]
    %v72 = vsub.f32 %v70, %v71
    %73 = vst.msk [vmem:[%s2] sm:$0xff] %vm39, %v72
  $region17: #{tpu_custom_call.1} parent=0 // pred_fallthru
    _
  // Predicated region
  $region18: #{tpu_custom_call.1} parent=0 // pred_check
    _
  $region19: #{tpu_custom_call.1} parent=0 // pred_check_branch
    %75 = sbr.rel (0) target = $region21
  $region20: #{tpu_custom_call.1} parent=0 // pred_region
    _
  $region21: #{tpu_custom_call.1} parent=0 // pred_fallthru
    _
  // Predicated region
  $region22: #{tpu_custom_call.1} parent=0 // pred_check
    _
  $region23: #{tpu_custom_call.1} parent=0 // pred_check_branch
    %77 = sbr.rel (0) target = $region25
  $region24: #{tpu_custom_call.1} parent=0 // pred_region
    _
  $region25: #{tpu_custom_call.1} parent=0 // pred_fallthru
    _

</llo_original>
